<compile_context>
chip_gen: v7x
topology: tpu7x:2x2x1
jax: 0.10.0
libtpu: 0.0.40
codegen_flags: <defaults>
</compile_context>

<pallas_src>
import jax
import jax.numpy as jnp
from jax.experimental import pallas as pl
from jax.experimental.pallas import tpu as pltpu

# ---- constants mirroring the PyTorch codebase ------------------------------
BB_N, BB_CA, BB_C, BB_O = 0, 1, 2, 3     # BBHeavyAtom indices
AA_UNK = 21                              # AALib.UNK
NUM_FREQ_BANDS = 3                       # DihedralEncoding default
DIHED_DIM = 3 * (1 + 2 * 2 * NUM_FREQ_BANDS)   # 39


def _round_up(x, m):
    return ((x + m - 1) // m) * m


def _cdiv(a, b):
    return (a + b - 1) // b


# ---------------------------------------------------------------------------
# Geometry / encoding helpers (plain-JAX glue, matching the reference utils)
# ---------------------------------------------------------------------------
def _normalize(v, eps=1e-6):
    return v / (jnp.linalg.norm(v, axis=-1, keepdims=True) + eps)


def get_3d_basis(center, p1, p2):
    """Orthonormal basis from CA (center), C (p1), N (p2).  Returns (N,L,3,3)."""
    v1 = p1 - center
    e1 = _normalize(v1)
    v2 = p2 - center
    u2 = v2 - (e1 * v2).sum(-1, keepdims=True) * e1
    e2 = _normalize(u2)
    e3 = jnp.cross(e1, e2)
    return jnp.stack([e1, e2, e3], axis=-1)  # columns e1,e2,e3


def global2local(R, t, q):
    """q: (N,L,A,3) global coords -> local coords p = R^T (q - t)."""
    q_rel = q - t[:, :, None, :]
    return jnp.einsum('nlji,nlaj->nlai', R, q_rel)


def dihedral_from_four_points(p0, p1, p2, p3):
    v0 = p2 - p1
    v1 = p0 - p1
    v2 = p3 - p2
    u1 = jnp.cross(v0, v1)
    n1 = u1 / jnp.linalg.norm(u1, axis=-1, keepdims=True)
    u2 = jnp.cross(v0, v2)
    n2 = u2 / jnp.linalg.norm(u2, axis=-1, keepdims=True)
    sgn = jnp.sign((jnp.cross(v1, v2) * v0).sum(-1))
    dihed = sgn * jnp.arccos(jnp.clip((n1 * n2).sum(-1), -0.999999, 0.999999))
    return jnp.nan_to_num(dihed)


def get_bb_dihedral_angles(pos_atoms, chain_nb, res_nb, mask_residue):
    """Omega / Phi / Psi backbone dihedrals.  Returns ((N,L,3), (N,L,3) float mask).

    NOTE: the reference module passes fragment_type as chain_nb here; we keep
    that behavior to match the spec.
    """
    pos_N = pos_atoms[:, :, BB_N]
    pos_CA = pos_atoms[:, :, BB_CA]
    pos_C = pos_atoms[:, :, BB_C]

    d_res = jnp.abs(res_nb[:, 1:] - res_nb[:, :-1])
    same_chain = chain_nb[:, 1:] == chain_nb[:, :-1]
    consec = (d_res == 1) & same_chain & mask_residue[:, :-1] & mask_residue[:, 1:]
    n_term = jnp.pad(~consec, ((0, 0), (1, 0)), constant_values=True)
    c_term = jnp.pad(~consec, ((0, 0), (0, 1)), constant_values=True)

    omega_mask = ~n_term
    phi_mask = ~n_term
    psi_mask = ~c_term

    omega = jnp.pad(
        dihedral_from_four_points(pos_CA[:, :-1], pos_C[:, :-1], pos_N[:, 1:], pos_CA[:, 1:]),
        ((0, 0), (1, 0)))
    phi = jnp.pad(
        dihedral_from_four_points(pos_C[:, :-1], pos_N[:, 1:], pos_CA[:, 1:], pos_C[:, 1:]),
        ((0, 0), (1, 0)))
    psi = jnp.pad(
        dihedral_from_four_points(pos_N[:, :-1], pos_CA[:, :-1], pos_C[:, :-1], pos_N[:, 1:]),
        ((0, 0), (0, 1)))

    mask_bb = jnp.stack([omega_mask, phi_mask, psi_mask], axis=-1).astype(jnp.float32)
    bb_dihedral = jnp.stack([omega, phi, psi], axis=-1) * mask_bb
    return bb_dihedral, mask_bb


def dihedral_encoding(x):
    """x: (N,L,3) angles -> (N,L,3,1+2*2*num_freq_bands)."""
    freq = jnp.concatenate([
        jnp.arange(1, NUM_FREQ_BANDS + 1, dtype=jnp.float32),
        1.0 / jnp.arange(1, NUM_FREQ_BANDS + 1, dtype=jnp.float32),
    ])
    x_ = x[..., None]
    return jnp.concatenate([x_, jnp.sin(x_ * freq), jnp.cos(x_ * freq)], axis=-1)


def _build_features(params, aa, res_nb, fragment_type, pos_atoms, mask_atoms,
                    num_atoms, structure_mask=None, sequence_mask=None):
    """Shared feature-assembly glue.  Returns
    (aa_effective, aa_emb, local_flat(N,L,A*3), dihed_emb(N,L,39), chain_emb, mask_residue)."""
    n, l = aa.shape
    mask_residue = mask_atoms[:, :, BB_CA]                   # (N, L) bool
    pos_atoms = pos_atoms[:, :, :num_atoms]
    mask_atoms = mask_atoms[:, :, :num_atoms]

    chain_emb = params['chain_emb'][fragment_type]           # (N, L, D)
    if sequence_mask is not None:
        aa = jnp.where(sequence_mask, aa, AA_UNK)
    aa_emb = params['aa_emb'][aa]                            # (N, L, D)

    bb_center = pos_atoms[:, :, BB_CA]
    R = get_3d_basis(bb_center, pos_atoms[:, :, BB_C], pos_atoms[:, :, BB_N])
    local_coords = global2local(R, bb_center, pos_atoms)     # (N, L, A, 3)
    local_coords = jnp.where(mask_atoms[:, :, :, None], local_coords, 0.0)
    local_flat = local_coords.reshape(n, l, num_atoms * 3)
    if structure_mask is not None:
        local_flat = local_flat * structure_mask[:, :, None].astype(local_flat.dtype)

    bb_dihedral, mask_bb = get_bb_dihedral_angles(pos_atoms, fragment_type,
                                                  res_nb, mask_residue)
    dihed_emb = dihedral_encoding(bb_dihedral) * mask_bb[:, :, :, None]
    dihed_emb = dihed_emb.reshape(n, l, -1)                  # (N, L, 39)
    if structure_mask is not None:
        dihed_mask = (structure_mask & jnp.roll(structure_mask, 1, axis=1)
                      & jnp.roll(structure_mask, -1, axis=1))
        dihed_emb = dihed_emb * dihed_mask[:, :, None].astype(dihed_emb.dtype)

    return aa, aa_emb, local_flat, dihed_emb, chain_emb, mask_residue


# ---------------------------------------------------------------------------
# Pallas kernel: 4-layer MLP (bf16 MXU, f32 accumulation), residue mask read
# from the last (padding) lane of the feats block, bf16 output.
# ---------------------------------------------------------------------------
def _mlp_kernel(x_ref, c_ref, w1_ref, b1_ref, w2_ref, b2_ref,
                w3_ref, b3_ref, w4_ref, b4_ref, o_ref):
    x = x_ref[...]                                       # (tile_m, K_pad) bf16
    kp = x.shape[-1]
    # 0/1 residue mask stashed in the last (zero-weight) padding lane of feats.
    mask = x[:, kp - 1:kp].astype(jnp.float32)           # (tile_m, 1)

    # Layer 1: dense features + precomputed one-hot slab contribution (bf16 in
    # HBM, upcast to f32 on the VPU — free filler in a mem-bound kernel).
    h = jnp.dot(x, w1_ref[...], preferred_element_type=jnp.float32)
    h = jnp.maximum(h + c_ref[...].astype(jnp.float32) + b1_ref[...], 0.0)
    h = jnp.dot(h.astype(jnp.bfloat16), w2_ref[...], preferred_element_type=jnp.float32)
    h = jnp.maximum(h + b2_ref[...], 0.0)
    h = jnp.dot(h.astype(jnp.bfloat16), w3_ref[...], preferred_element_type=jnp.float32)
    h = jnp.maximum(h + b3_ref[...], 0.0)
    out = jnp.dot(h.astype(jnp.bfloat16), w4_ref[...], preferred_element_type=jnp.float32)
    out = (out + b4_ref[...]) * mask
    o_ref[...] = out.astype(o_ref.dtype)


def _choose_tile_m(M, tile_m_max=2048):
    """Large tiles to amortize grid-step overhead, but keep >=4 grid steps (v7x
    has 2 TensorCores sharded over the parallel axis) and keep zero-row padding
    waste under ~12%."""
    m8 = _round_up(max(M, 8), 8)
    if m8 <= 512:
        return m8                      # tiny problem: one step is fine
    tile = min(tile_m_max, max(256, _round_up(_cdiv(m8, 4), 256)))
    while tile > 256 and (_round_up(m8, tile) - M) * 8 > M:
        tile //= 2
    return tile


def mlp_pallas(feats, contrib, prep, residue_dim, tile_m_max=2048):
    """feats: (M, K_pad) bf16 (mask stashed in last lane), contrib: (M, H1_pad) bf16.
    Returns (M, residue_dim) f32."""
    M, K_pad = feats.shape
    H1_pad = contrib.shape[1]
    Dout_pad = prep['w4'].shape[1]

    tile_m = _choose_tile_m(M, tile_m_max)
    m_pad = _round_up(M, tile_m)
    if m_pad > M:
        feats = jnp.pad(feats, ((0, m_pad - M), (0, 0)))
        contrib = jnp.pad(contrib, ((0, m_pad - M), (0, 0)))

    def full_spec(arr):
        return pl.BlockSpec(arr.shape, lambda i: (0, 0))

    out = pl.pallas_call(
        _mlp_kernel,
        out_shape=jax.ShapeDtypeStruct((m_pad, Dout_pad), jnp.bfloat16),
        grid_spec=pltpu.PrefetchScalarGridSpec(
            num_scalar_prefetch=0,
            grid=(m_pad // tile_m,),
            in_specs=[
                pl.BlockSpec((tile_m, K_pad), lambda i: (i, 0)),
                pl.BlockSpec((tile_m, H1_pad), lambda i: (i, 0)),
                full_spec(prep['w1']), full_spec(prep['b1']),
                full_spec(prep['w2']), full_spec(prep['b2']),
                full_spec(prep['w3']), full_spec(prep['b3']),
                full_spec(prep['w4']), full_spec(prep['b4']),
            ],
            out_specs=pl.BlockSpec((tile_m, Dout_pad), lambda i: (i, 0)),
        ),
        compiler_params=pltpu.CompilerParams(
            dimension_semantics=("parallel",)),
    )(feats, contrib, prep['w1'], prep['b1'], prep['w2'], prep['b2'],
      prep['w3'], prep['b3'], prep['w4'], prep['b4'])
    # Only the useful (M, residue_dim) slice is upcast back to f32.
    return out[:M, :residue_dim].astype(jnp.float32)


# ---------------------------------------------------------------------------
# Parameter init (deterministic, synthetic) + kernel-ready parameter prep
# ---------------------------------------------------------------------------
def init_params(key, residue_dim, num_atoms, max_aa_types=22, max_chain_types=10):
    input_dim = residue_dim + max_aa_types * num_atoms * 3 + DIHED_DIM + residue_dim
    ks = jax.random.split(key, 6)

    def lin(k, din, dout):
        kw, kb = jax.random.split(k)
        bound = 1.0 / jnp.sqrt(din)
        w = jax.random.uniform(kw, (din, dout), jnp.float32, -bound, bound)
        b = jax.random.uniform(kb, (1, dout), jnp.float32, -bound, bound)
        return w, b

    params = {
        'aa_emb': jax.random.normal(ks[0], (max_aa_types, residue_dim), jnp.float32),
        # padding_idx=0 -> row 0 is zero
        'chain_emb': jax.random.normal(ks[1], (max_chain_types, residue_dim),
                                       jnp.float32).at[0].set(0.0),
    }
    params['w1'], params['b1'] = lin(ks[2], input_dim, 2 * residue_dim)
    params['w2'], params['b2'] = lin(ks[3], 2 * residue_dim, residue_dim)
    params['w3'], params['b3'] = lin(ks[4], residue_dim, residue_dim)
    params['w4'], params['b4'] = lin(ks[5], residue_dim, residue_dim)
    return params, input_dim


def prepare_mlp_params(params, residue_dim, num_atoms, max_aa_types=22):
    """Split W1 into dense rows + per-aa one-hot slab, pad every matmul dim to a
    multiple of 128, and cast weights to bf16 (biases stay f32).  Correctness of
    the padded columns relies on all weight/bias/contrib padding being exactly
    zero (ReLU(0)=0 feeding zero rows of the next layer) — do not change."""
    D = residue_dim
    A3 = num_atoms * 3
    H1 = 2 * D
    onehot_cols = max_aa_types * A3

    w1 = params['w1']                                 # (input_dim, 2D)
    # feature row order: [aa_emb (D), one-hot coords (22*A*3), dihedral (39), chain_emb (D)]
    w1_aa = w1[:D]
    w1_hot = w1[D:D + onehot_cols].reshape(max_aa_types, A3, H1)
    w1_rest = w1[D + onehot_cols:]
    w1_dense = jnp.concatenate([w1_aa, w1_rest], axis=0)  # (D + 39 + D, 2D)

    K_pad = _round_up(w1_dense.shape[0], 128)
    H1_pad = _round_up(H1, 128)
    H_pad = _round_up(D, 128)

    def pad2(a, r, c):
        return jnp.pad(a, ((0, r - a.shape[0]), (0, c - a.shape[1])))

    return {
        'w1_hot': w1_hot.astype(jnp.bfloat16),                      # (22, A*3, 2D)
        'w1': pad2(w1_dense, K_pad, H1_pad).astype(jnp.bfloat16),
        'b1': pad2(params['b1'], 1, H1_pad).astype(jnp.float32),
        'w2': pad2(params['w2'], H1_pad, H_pad).astype(jnp.bfloat16),
        'b2': pad2(params['b2'], 1, H_pad).astype(jnp.float32),
        'w3': pad2(params['w3'], H_pad, H_pad).astype(jnp.bfloat16),
        'b3': pad2(params['b3'], 1, H_pad).astype(jnp.float32),
        'w4': pad2(params['w4'], H_pad, H_pad).astype(jnp.bfloat16),
        'b4': pad2(params['b4'], 1, H_pad).astype(jnp.float32),
        'K_dense': w1_dense.shape[0], 'K_pad': K_pad,
        'H1': H1, 'H1_pad': H1_pad,
    }


# ---------------------------------------------------------------------------
# Full forward (Pallas) and pure-JAX reference
# ---------------------------------------------------------------------------
def residue_embedding_forward(params, prep, aa, res_nb, fragment_type, pos_atoms,
                              mask_atoms, residue_dim, num_atoms, max_aa_types=22,
                              structure_mask=None, sequence_mask=None, tile_m_max=2048):
    n, l = aa.shape
    aa_eff, aa_emb, local_flat, dihed_emb, chain_emb, mask_residue = _build_features(
        params, aa, res_nb, fragment_type, pos_atoms, mask_atoms, num_atoms,
        structure_mask, sequence_mask)

    mask_f = mask_residue.astype(jnp.float32)[:, :, None]     # (N, L, 1)

    # One-hot coordinate block contribution to the layer-1 pre-activation:
    # equivalent to (one-hot expanded coords) @ W1[onehot rows], but only the 12
    # nonzero columns per residue are contracted.  Slab table is bf16; result is
    # emitted directly in its padded bf16 kernel layout.
    slab = prep['w1_hot'][aa_eff]                              # (N, L, A*3, 2D) bf16
    lc_contrib = jnp.einsum('nlk,nlkh->nlh',
                            local_flat.astype(jnp.bfloat16), slab,
                            preferred_element_type=jnp.float32)  # (N, L, 2D)
    # TODO(synk): for very long sequences move this gather/contraction in-kernel
    # (scalar-prefetch aa ids + pl.ds into a VMEM-resident w1_hot) to drop the
    # contrib HBM stream entirely.

    K = prep['K_dense']                 # 2D + 39 (always odd -> at least 1 pad lane)
    K_pad, H1, H1_pad = prep['K_pad'], prep['H1'], prep['H1_pad']

    # Fused assembly: input-masked dense features, zero padding, and the 0/1
    # residue mask stashed in the last padding lane — one concat, one bf16 cast.
    feats = jnp.concatenate([
        aa_emb * mask_f,
        dihed_emb * mask_f,
        chain_emb * mask_f,
        jnp.zeros((n, l, K_pad - K - 1), jnp.float32),
        mask_f,
    ], axis=-1).astype(jnp.bfloat16).reshape(n * l, K_pad)

    contrib = jnp.concatenate([
        lc_contrib * mask_f,
        jnp.zeros((n, l, H1_pad - H1), jnp.float32),
    ], axis=-1).astype(jnp.bfloat16).reshape(n * l, H1_pad)

    out = mlp_pallas(feats, contrib, prep, residue_dim, tile_m_max=tile_m_max)
    return out.reshape(n, l, residue_dim)


def residue_embedding_reference(params, aa, res_nb, fragment_type, pos_atoms,
                                mask_atoms, residue_dim, num_atoms, max_aa_types=22,
                                structure_mask=None, sequence_mask=None):
    """Pure-JAX reference with the full one-hot expansion (matches PyTorch module)."""
    n, l = aa.shape
    aa_eff, aa_emb, local_flat, dihed_emb, chain_emb, mask_residue = _build_features(
        params, aa, res_nb, fragment_type, pos_atoms, mask_atoms, num_atoms,
        structure_mask, sequence_mask)
    onehot = (aa_eff[:, :, None] == jnp.arange(max_aa_types)[None, None, :]).astype(jnp.float32)
    lc = onehot[:, :, :, None] * local_flat[:, :, None, :]    # (N, L, 22, A*3)
    lc = lc.reshape(n, l, max_aa_types * num_atoms * 3)
    x = jnp.concatenate([aa_emb, lc, dihed_emb, chain_emb], axis=-1)
    x = x * mask_residue[:, :, None].astype(x.dtype)
    h = jnp.maximum(x @ params['w1'] + params['b1'], 0.0)
    h = jnp.maximum(h @ params['w2'] + params['b2'], 0.0)
    h = jnp.maximum(h @ params['w3'] + params['b3'], 0.0)
    out = h @ params['w4'] + params['b4']
    return out * mask_residue[:, :, None].astype(out.dtype)


# ---------------------------------------------------------------------------
if __name__ == "__main__":
    key = jax.random.PRNGKey(0)
    N, L = 2, 8
    residue_dim = 32
    num_atoms = 4          # N, CA, C, O backbone heavy atoms used for features
    A = 5                  # atoms present in the input tensor (>= num_atoms)
    max_aa_types, max_chain_types = 22, 10

    kp, k1, k2, k3, k4 = jax.random.split(key, 5)
    params, input_dim = init_params(kp, residue_dim, num_atoms,
                                    max_aa_types, max_chain_types)
    prep = prepare_mlp_params(params, residue_dim, num_atoms, max_aa_types)

    aa = jax.random.randint(k1, (N, L), 0, 20)
    res_nb = jnp.tile(jnp.arange(1, L + 1, dtype=jnp.int32)[None, :], (N, 1))
    fragment_type = jnp.tile(jnp.array([[1], [2]], dtype=jnp.int32), (1, L))
    pos_atoms = jax.random.normal(k3, (N, L, A, 3), jnp.float32) * 3.0
    mask_atoms = jax.random.uniform(k4, (N, L, A)) > 0.1

    out = residue_embedding_forward(params, prep, aa, res_nb, fragment_type,
                                    pos_atoms, mask_atoms,
                                    residue_dim, num_atoms, max_aa_types)
    out = jax.block_until_ready(out)

    ref = residue_embedding_reference(params, aa, res_nb, fragment_type,
                                      pos_atoms, mask_atoms,
                                      residue_dim, num_atoms, max_aa_types)
    assert out.shape == (N, L, residue_dim)
    assert bool(jnp.all(jnp.isfinite(out)))
    max_err = float(jnp.max(jnp.abs(out - ref)))
    assert max_err < 1e-1, f"max abs error vs reference too large: {max_err}"
    print("KERNEL_OK")
</pallas_src>

<mosaic_0001>
module attributes {stable_mosaic.version = 11 : i64} {
  func.func @_mlp_kernel(%arg0: i32, %arg1: memref<16x128xbf16, #tpu.memory_space<vmem>>, %arg2: memref<16x128xbf16, #tpu.memory_space<vmem>>, %arg3: memref<128x128xbf16, #tpu.memory_space<vmem>>, %arg4: memref<1x128xf32, #tpu.memory_space<vmem>>, %arg5: memref<128x128xbf16, #tpu.memory_space<vmem>>, %arg6: memref<1x128xf32, #tpu.memory_space<vmem>>, %arg7: memref<128x128xbf16, #tpu.memory_space<vmem>>, %arg8: memref<1x128xf32, #tpu.memory_space<vmem>>, %arg9: memref<128x128xbf16, #tpu.memory_space<vmem>>, %arg10: memref<1x128xf32, #tpu.memory_space<vmem>>, %arg11: memref<16x128xbf16, #tpu.memory_space<vmem>>) attributes {dimension_semantics = [#tpu.dimension_semantics<parallel>], iteration_bounds = array<i64: 1>, scalar_prefetch = 0 : i64, scratch_operands = 0 : i64, tpu.core_type = #tpu.core_type<tc>, window_params = [{transform_indices = @transform_0, window_bounds = array<i64: 16, 128>}, {transform_indices = @transform_1, window_bounds = array<i64: 16, 128>}, {pipeline_mode = #tpu.pipeline_mode<synchronous>, transform_indices = @transform_2, window_bounds = array<i64: 128, 128>}, {pipeline_mode = #tpu.pipeline_mode<synchronous>, transform_indices = @transform_3, window_bounds = array<i64: 1, 128>}, {pipeline_mode = #tpu.pipeline_mode<synchronous>, transform_indices = @transform_4, window_bounds = array<i64: 128, 128>}, {pipeline_mode = #tpu.pipeline_mode<synchronous>, transform_indices = @transform_5, window_bounds = array<i64: 1, 128>}, {pipeline_mode = #tpu.pipeline_mode<synchronous>, transform_indices = @transform_6, window_bounds = array<i64: 128, 128>}, {pipeline_mode = #tpu.pipeline_mode<synchronous>, transform_indices = @transform_7, window_bounds = array<i64: 1, 128>}, {pipeline_mode = #tpu.pipeline_mode<synchronous>, transform_indices = @transform_8, window_bounds = array<i64: 128, 128>}, {pipeline_mode = #tpu.pipeline_mode<synchronous>, transform_indices = @transform_9, window_bounds = array<i64: 1, 128>}, {transform_indices = @transform_10, window_bounds = array<i64: 16, 128>}]} {
    %c0 = arith.constant 0 : index
    %c0_0 = arith.constant 0 : index
    %0 = vector.load %arg1[%c0, %c0_0] : memref<16x128xbf16, #tpu.memory_space<vmem>>, vector<16x128xbf16>
    %1 = vector.extract_strided_slice %0 {offsets = [0, 127], sizes = [16, 1], strides = [1, 1]} : vector<16x128xbf16> to vector<16x1xbf16>
    %2 = arith.extf %1 : vector<16x1xbf16> to vector<16x1xf32>
    %c0_1 = arith.constant 0 : index
    %c0_2 = arith.constant 0 : index
    %3 = vector.load %arg3[%c0_1, %c0_2] : memref<128x128xbf16, #tpu.memory_space<vmem>>, vector<128x128xbf16>
    %cst = arith.constant dense<0.000000e+00> : vector<16x128xf32>
    %4 = tpu.matmul %0, %3, %cst {dimension_numbers = #tpu.dot_dimension_numbers<[1], [0], [0], [1], [0, 0, 1, 1], [], []>} : vector<16x128xbf16>, vector<128x128xbf16>, vector<16x128xf32> -> vector<16x128xf32>
    %c0_3 = arith.constant 0 : index
    %c0_4 = arith.constant 0 : index
    %5 = vector.load %arg2[%c0_3, %c0_4] : memref<16x128xbf16, #tpu.memory_space<vmem>>, vector<16x128xbf16>
    %6 = arith.extf %5 : vector<16x128xbf16> to vector<16x128xf32>
    %7 = arith.addf %4, %6 : vector<16x128xf32>
    %c0_5 = arith.constant 0 : index
    %c0_6 = arith.constant 0 : index
    %8 = vector.load %arg4[%c0_5, %c0_6] : memref<1x128xf32, #tpu.memory_space<vmem>>, vector<1x128xf32>
    %9 = vector.broadcast %8 : vector<1x128xf32> to vector<16x128xf32>
    %10 = arith.addf %7, %9 : vector<16x128xf32>
    %cst_7 = arith.constant 0.000000e+00 : f32
    %11 = vector.broadcast %cst_7 : f32 to vector<16x128xf32>
    %12 = arith.maximumf %10, %11 : vector<16x128xf32>
    %13 = arith.truncf %12 : vector<16x128xf32> to vector<16x128xbf16>
    %c0_8 = arith.constant 0 : index
    %c0_9 = arith.constant 0 : index
    %14 = vector.load %arg5[%c0_8, %c0_9] : memref<128x128xbf16, #tpu.memory_space<vmem>>, vector<128x128xbf16>
    %cst_10 = arith.constant dense<0.000000e+00> : vector<16x128xf32>
    %15 = tpu.matmul %13, %14, %cst_10 {dimension_numbers = #tpu.dot_dimension_numbers<[1], [0], [0], [1], [0, 0, 1, 1], [], []>} : vector<16x128xbf16>, vector<128x128xbf16>, vector<16x128xf32> -> vector<16x128xf32>
    %c0_11 = arith.constant 0 : index
    %c0_12 = arith.constant 0 : index
    %16 = vector.load %arg6[%c0_11, %c0_12] : memref<1x128xf32, #tpu.memory_space<vmem>>, vector<1x128xf32>
    %17 = vector.broadcast %16 : vector<1x128xf32> to vector<16x128xf32>
    %18 = arith.addf %15, %17 : vector<16x128xf32>
    %cst_13 = arith.constant 0.000000e+00 : f32
    %19 = vector.broadcast %cst_13 : f32 to vector<16x128xf32>
    %20 = arith.maximumf %18, %19 : vector<16x128xf32>
    %21 = arith.truncf %20 : vector<16x128xf32> to vector<16x128xbf16>
    %c0_14 = arith.constant 0 : index
    %c0_15 = arith.constant 0 : index
    %22 = vector.load %arg7[%c0_14, %c0_15] : memref<128x128xbf16, #tpu.memory_space<vmem>>, vector<128x128xbf16>
    %cst_16 = arith.constant dense<0.000000e+00> : vector<16x128xf32>
    %23 = tpu.matmul %21, %22, %cst_16 {dimension_numbers = #tpu.dot_dimension_numbers<[1], [0], [0], [1], [0, 0, 1, 1], [], []>} : vector<16x128xbf16>, vector<128x128xbf16>, vector<16x128xf32> -> vector<16x128xf32>
    %c0_17 = arith.constant 0 : index
    %c0_18 = arith.constant 0 : index
    %24 = vector.load %arg8[%c0_17, %c0_18] : memref<1x128xf32, #tpu.memory_space<vmem>>, vector<1x128xf32>
    %25 = vector.broadcast %24 : vector<1x128xf32> to vector<16x128xf32>
    %26 = arith.addf %23, %25 : vector<16x128xf32>
    %cst_19 = arith.constant 0.000000e+00 : f32
    %27 = vector.broadcast %cst_19 : f32 to vector<16x128xf32>
    %28 = arith.maximumf %26, %27 : vector<16x128xf32>
    %29 = arith.truncf %28 : vector<16x128xf32> to vector<16x128xbf16>
    %c0_20 = arith.constant 0 : index
    %c0_21 = arith.constant 0 : index
    %30 = vector.load %arg9[%c0_20, %c0_21] : memref<128x128xbf16, #tpu.memory_space<vmem>>, vector<128x128xbf16>
    %cst_22 = arith.constant dense<0.000000e+00> : vector<16x128xf32>
    %31 = tpu.matmul %29, %30, %cst_22 {dimension_numbers = #tpu.dot_dimension_numbers<[1], [0], [0], [1], [0, 0, 1, 1], [], []>} : vector<16x128xbf16>, vector<128x128xbf16>, vector<16x128xf32> -> vector<16x128xf32>
    %c0_23 = arith.constant 0 : index
    %c0_24 = arith.constant 0 : index
    %32 = vector.load %arg10[%c0_23, %c0_24] : memref<1x128xf32, #tpu.memory_space<vmem>>, vector<1x128xf32>
    %33 = vector.broadcast %32 : vector<1x128xf32> to vector<16x128xf32>
    %34 = arith.addf %31, %33 : vector<16x128xf32>
    %35 = vector.broadcast %2 : vector<16x1xf32> to vector<16x128xf32>
    %36 = arith.mulf %34, %35 : vector<16x128xf32>
    %37 = arith.truncf %36 : vector<16x128xf32> to vector<16x128xbf16>
    %c0_25 = arith.constant 0 : index
    %c0_26 = arith.constant 0 : index
    %38 = vector.load %arg11[%c0_25, %c0_26] : memref<16x128xbf16, #tpu.memory_space<vmem>>, vector<16x128xbf16>
    tpu.vector_store %arg11[%c0_25, %c0_26], %37 {strides = array<i32>} : memref<16x128xbf16, #tpu.memory_space<vmem>>, vector<16x128xbf16>,
    return
  }
  func.func @transform_0(%arg0: i32) -> (i32, i32) {
    %c0_i32 = arith.constant 0 : i32
    %c0_i32_0 = arith.constant 0 : i32
    return %arg0, %c0_i32 : i32, i32
  }
  func.func @transform_1(%arg0: i32) -> (i32, i32) {
    %c0_i32 = arith.constant 0 : i32
    %c0_i32_0 = arith.constant 0 : i32
    return %arg0, %c0_i32 : i32, i32
  }
  func.func @transform_2(%arg0: i32) -> (i32, i32) {
    %c0_i32 = arith.constant 0 : i32
    %c0_i32_0 = arith.constant 0 : i32
    %c0_i32_1 = arith.constant 0 : i32
    return %c0_i32, %c0_i32_0 : i32, i32
  }
  func.func @transform_3(%arg0: i32) -> (i32, i32) {
    %c0_i32 = arith.constant 0 : i32
    %c0_i32_0 = arith.constant 0 : i32
    %c0_i32_1 = arith.constant 0 : i32
    return %c0_i32, %c0_i32_0 : i32, i32
  }
  func.func @transform_4(%arg0: i32) -> (i32, i32) {
    %c0_i32 = arith.constant 0 : i32
    %c0_i32_0 = arith.constant 0 : i32
    %c0_i32_1 = arith.constant 0 : i32
    return %c0_i32, %c0_i32_0 : i32, i32
  }
  func.func @transform_5(%arg0: i32) -> (i32, i32) {
    %c0_i32 = arith.constant 0 : i32
    %c0_i32_0 = arith.constant 0 : i32
    %c0_i32_1 = arith.constant 0 : i32
    return %c0_i32, %c0_i32_0 : i32, i32
  }
  func.func @transform_6(%arg0: i32) -> (i32, i32) {
    %c0_i32 = arith.constant 0 : i32
    %c0_i32_0 = arith.constant 0 : i32
    %c0_i32_1 = arith.constant 0 : i32
    return %c0_i32, %c0_i32_0 : i32, i32
  }
  func.func @transform_7(%arg0: i32) -> (i32, i32) {
    %c0_i32 = arith.constant 0 : i32
    %c0_i32_0 = arith.constant 0 : i32
    %c0_i32_1 = arith.constant 0 : i32
    return %c0_i32, %c0_i32_0 : i32, i32
  }
  func.func @transform_8(%arg0: i32) -> (i32, i32) {
    %c0_i32 = arith.constant 0 : i32
    %c0_i32_0 = arith.constant 0 : i32
    %c0_i32_1 = arith.constant 0 : i32
    return %c0_i32, %c0_i32_0 : i32, i32
  }
  func.func @transform_9(%arg0: i32) -> (i32, i32) {
    %c0_i32 = arith.constant 0 : i32
    %c0_i32_0 = arith.constant 0 : i32
    %c0_i32_1 = arith.constant 0 : i32
    return %c0_i32, %c0_i32_0 : i32, i32
  }
  func.func @transform_10(%arg0: i32) -> (i32, i32) {
    %c0_i32 = arith.constant 0 : i32
    %c0_i32_0 = arith.constant 0 : i32
    return %arg0, %c0_i32 : i32, i32
  }
}

</mosaic_0001>

<llo_original>
// kernel: tpu_custom_call.1
$region0: #{tpu_custom_call.1}
  #allocation0 [shape = 'u32[]', space=smem, size = 0x4, offset = 0x4, fixed_abs, tag = 'smem constant byte address 0x4 - core index']
  #allocation1 [shape = 'u32[144,128]{1,0:T(1,128)}', space=vmem, size = 0x12000, scoped, tag = 'internal scratch']
  %s0 = inlined_call_operand.hbm [shape: bf16[16,128], index: 0, kind: input, shape index: {}]
  %s1 = inlined_call_operand.hbm [shape: bf16[16,128], index: 1, kind: input, shape index: {}]
  %s2 = inlined_call_operand.hbm [shape: bf16[128,128], index: 2, kind: input, shape index: {}]
  %s3 = inlined_call_operand.vmem [shape: f32[1,128], index: 3, kind: input, shape index: {}]
  %s4 = inlined_call_operand.hbm [shape: bf16[128,128], index: 4, kind: input, shape index: {}]
  %s5 = inlined_call_operand.vmem [shape: f32[1,128], index: 5, kind: input, shape index: {}]
  %s6 = inlined_call_operand.hbm [shape: bf16[128,128], index: 6, kind: input, shape index: {}]
  %s7 = inlined_call_operand.vmem [shape: f32[1,128], index: 7, kind: input, shape index: {}]
  %s8 = inlined_call_operand.hbm [shape: bf16[128,128], index: 8, kind: input, shape index: {}]
  %s9 = inlined_call_operand.vmem [shape: f32[1,128], index: 9, kind: input, shape index: {}]
  %s10 = inlined_call_operand.hbm [shape: bf16[16,128], index: 10, kind: output, shape index: {}]
  %s11 = sld [smem:[#allocation0]]
  $region74: #{tpu_custom_call.1} parent=0
    _
  %s13 = ssub.s32 1, %s11
  %s14 = scalar_select 0, %s13, %s11
  $region1: #{tpu_custom_call.1} parent=0
    #allocation2 [shape = 'u8[4096]{0}', space=vmem, size = 0x1000, scoped, tag = 'input window, operand 0, single buffered']
    #allocation3 [shape = 's32[1]{0}', space=sflag, size = 0x4, scoped, tag = 'scoped memory for tpu_custom_call.1']
    #allocation4 [shape = 's32[1]{0}', space=sflag, size = 0x4, scoped, tag = 'scoped memory for tpu_custom_call.1']
    #allocation5 [shape = 'u8[4096]{0}', space=vmem, size = 0x1000, scoped, tag = 'input window, operand 1, single buffered']
    #allocation6 [shape = 's32[1]{0}', space=sflag, size = 0x4, scoped, tag = 'scoped memory for tpu_custom_call.1']
    #allocation7 [shape = 'u8[32768]{0}', space=vmem, size = 0x8000, scoped, tag = 'input window, operand 2, single buffered']
    #allocation8 [shape = 'u8[32768]{0}', space=vmem, size = 0x8000, scoped, tag = 'input window, operand 4, single buffered']
    #allocation9 [shape = 's32[1]{0}', space=sflag, size = 0x4, scoped, tag = 'scoped memory for tpu_custom_call.1']
    #allocation10 [shape = 'u8[32768]{0}', space=vmem, size = 0x8000, scoped, tag = 'input window, operand 6, single buffered']
    #allocation11 [shape = 'u8[32768]{0}', space=vmem, size = 0x8000, scoped, tag = 'input window, operand 8, single buffered']
    #allocation12 [shape = 's32[1]{0}', space=sflag, size = 0x4, scoped, tag = 'scoped memory for tpu_custom_call.1']
    #allocation13 [shape = 'u8[4096]{0}', space=vmem, size = 0x1000, scoped, tag = 'output window, operand 0, single buffered']
    %15 = vsyncpa [#allocation3], 0
    %16 = vsyncpa [#allocation6], 0
    %17 = vsyncpa [#allocation9], 0
    %18 = vsyncpa [#allocation12], 0
    %19 = vsyncpa [#allocation4], 0
    // Predicated region
    $region2: #{tpu_custom_call.1} parent=1 // pred_check
      _
    $region3: #{tpu_custom_call.1} parent=1 // pred_check_branch
      %21 = sbr.rel (0) target = $region5
    $region4: #{tpu_custom_call.1} parent=1 // pred_region
      %s23 = ssub.s32 128, 128
      %24 = vsyncadd [#allocation3], %s23
      %s25 = sshll.u32 [#allocation2], 4
      %s26 = int_to_ptr.vmem [resolvable:$true] %s25
      %31 = dma.hbm_to_vmem [thread:$0]  %s0, 128, %s26, [#allocation3], 64, 64, 4
    $region5: #{tpu_custom_call.1} parent=1 // pred_fallthru
      _
    // Predicated region
    $region6: #{tpu_custom_call.1} parent=1 // pred_check
      _
    $region7: #{tpu_custom_call.1} parent=1 // pred_check_branch
      %33 = sbr.rel (0) target = $region9
    $region8: #{tpu_custom_call.1} parent=1 // pred_region
      %s35 = ssub.s32 128, 128
      %36 = vsyncadd [#allocation6], %s35
      %s37 = sshll.u32 [#allocation5], 4
      %s38 = int_to_ptr.vmem [resolvable:$true] %s37
      %43 = dma.hbm_to_vmem [thread:$0]  %s1, 128, %s38, [#allocation6], 64, 64, 4
    $region9: #{tpu_custom_call.1} parent=1 // pred_fallthru
      _
    // Predicated region
    $region10: #{tpu_custom_call.1} parent=1 // pred_check
      _
    $region11: #{tpu_custom_call.1} parent=1 // pred_check_branch
      %45 = sbr.rel (0) target = $region13
    $region12: #{tpu_custom_call.1} parent=1 // pred_region
      %s47 = ssub.s32 1024, 1024
      %48 = vsyncadd [#allocation6], %s47
      %s49 = sshll.u32 [#allocation7], 4
      %s50 = int_to_ptr.vmem [resolvable:$true] %s49
      %55 = dma.hbm_to_vmem [thread:$0]  %s2, 1024, %s50, [#allocation6], 64, 64, 4
    $region13: #{tpu_custom_call.1} parent=1 // pred_fallthru
      _
    // Predicated region
    $region14: #{tpu_custom_call.1} parent=1 // pred_check
      _
    $region15: #{tpu_custom_call.1} parent=1 // pred_check_branch
      %57 = sbr.rel (0) target = $region17
    $region16: #{tpu_custom_call.1} parent=1 // pred_region
      _
    $region17: #{tpu_custom_call.1} parent=1 // pred_fallthru
      _
    // Predicated region
    $region18: #{tpu_custom_call.1} parent=1 // pred_check
      _
    $region19: #{tpu_custom_call.1} parent=1 // pred_check_branch
      %59 = sbr.rel (0) target = $region21
    $region20: #{tpu_custom_call.1} parent=1 // pred_region
      %s61 = ssub.s32 1024, 1024
      %62 = vsyncadd [#allocation9], %s61
      %s63 = sshll.u32 [#allocation8], 4
      %s64 = int_to_ptr.vmem [resolvable:$true] %s63
      %69 = dma.hbm_to_vmem [thread:$0]  %s4, 1024, %s64, [#allocation9], 64, 64, 4
    $region21: #{tpu_custom_call.1} parent=1 // pred_fallthru
      _
    // Predicated region
    $region22: #{tpu_custom_call.1} parent=1 // pred_check
      _
    $region23: #{tpu_custom_call.1} parent=1 // pred_check_branch
      %71 = sbr.rel (0) target = $region25
    $region24: #{tpu_custom_call.1} parent=1 // pred_region
      _
    $region25: #{tpu_custom_call.1} parent=1 // pred_fallthru
      _
    // Predicated region
    $region26: #{tpu_custom_call.1} parent=1 // pred_check
      _
    $region27: #{tpu_custom_call.1} parent=1 // pred_check_branch
      %73 = sbr.rel (0) target = $region29
    $region28: #{tpu_custom_call.1} parent=1 // pred_region
      %s75 = ssub.s32 1024, 1024
      %76 = vsyncadd [#allocation9], %s75
      %s77 = sshll.u32 [#allocation10], 4
      %s78 = int_to_ptr.vmem [resolvable:$true] %s77
      %83 = dma.hbm_to_vmem [thread:$0]  %s6, 1024, %s78, [#allocation9], 64, 64, 4
    $region29: #{tpu_custom_call.1} parent=1 // pred_fallthru
      _
    // Predicated region
    $region30: #{tpu_custom_call.1} parent=1 // pred_check
      _
    $region31: #{tpu_custom_call.1} parent=1 // pred_check_branch
      %85 = sbr.rel (0) target = $region33
    $region32: #{tpu_custom_call.1} parent=1 // pred_region
      _
    $region33: #{tpu_custom_call.1} parent=1 // pred_fallthru
      _
    // Predicated region
    $region34: #{tpu_custom_call.1} parent=1 // pred_check
      _
    $region35: #{tpu_custom_call.1} parent=1 // pred_check_branch
      %87 = sbr.rel (0) target = $region37
    $region36: #{tpu_custom_call.1} parent=1 // pred_region
      %s89 = ssub.s32 1024, 1024
      %90 = vsyncadd [#allocation12], %s89
      %s91 = sshll.u32 [#allocation11], 4
      %s92 = int_to_ptr.vmem [resolvable:$true] %s91
      %97 = dma.hbm_to_vmem [thread:$0]  %s8, 1024, %s92, [#allocation12], 64, 64, 4
    $region37: #{tpu_custom_call.1} parent=1 // pred_fallthru
      _
    // Predicated region
    $region38: #{tpu_custom_call.1} parent=1 // pred_check
      _
    $region39: #{tpu_custom_call.1} parent=1 // pred_check_branch
      %99 = sbr.rel (0) target = $region41
    $region40: #{tpu_custom_call.1} parent=1 // pred_region
      _
    $region41: #{tpu_custom_call.1} parent=1 // pred_fallthru
      _
    // Predicated region
    $region42: #{tpu_custom_call.1} parent=1 // pred_check
      _
    $region43: #{tpu_custom_call.1} parent=1 // pred_check_branch
      %101 = sbr.rel (0) target = $region45
    $region44: #{tpu_custom_call.1} parent=1 // pred_region
      %102 = dma.done [#allocation3], 128
    $region45: #{tpu_custom_call.1} parent=1 // pred_fallthru
      _
    // Predicated region
    $region46: #{tpu_custom_call.1} parent=1 // pred_check
      _
    $region47: #{tpu_custom_call.1} parent=1 // pred_check_branch
      %104 = sbr.rel (0) target = $region49
    $region48: #{tpu_custom_call.1} parent=1 // pred_region
      %105 = dma.done [#allocation6], 128
    $region49: #{tpu_custom_call.1} parent=1 // pred_fallthru
      _
    // Predicated region
    $region50: #{tpu_custom_call.1} parent=1 // pred_check
      _
    $region51: #{tpu_custom_call.1} parent=1 // pred_check_branch
      %107 = sbr.rel (0) target = $region53
    $region52: #{tpu_custom_call.1} parent=1 // pred_region
      %108 = dma.done [#allocation6], 1024
    $region53: #{tpu_custom_call.1} parent=1 // pred_fallthru
      _
    // Predicated region
    $region54: #{tpu_custom_call.1} parent=1 // pred_check
      _
    $region55: #{tpu_custom_call.1} parent=1 // pred_check_branch
      %110 = sbr.rel (0) target = $region57
    $region56: #{tpu_custom_call.1} parent=1 // pred_region
      %111 = dma.done [#allocation9], 1024
    $region57: #{tpu_custom_call.1} parent=1 // pred_fallthru
      _
    // Predicated region
    $region58: #{tpu_custom_call.1} parent=1 // pred_check
      _
    $region59: #{tpu_custom_call.1} parent=1 // pred_check_branch
      %113 = sbr.rel (0) target = $region61
    $region60: #{tpu_custom_call.1} parent=1 // pred_region
      %114 = dma.done [#allocation9], 1024
    $region61: #{tpu_custom_call.1} parent=1 // pred_fallthru
      _
    // Predicated region
    $region62: #{tpu_custom_call.1} parent=1 // pred_check
      _
    $region63: #{tpu_custom_call.1} parent=1 // pred_check_branch
      %116 = sbr.rel (0) target = $region65
    $region64: #{tpu_custom_call.1} parent=1 // pred_region
      %117 = dma.done [#allocation12], 1024
    $region65: #{tpu_custom_call.1} parent=1 // pred_fallthru
      _
    %v119 = vld [vmem:[#allocation2] sm:$0xf]
    %v120 = vld [vmem:[#allocation2 + $0x4] sm:$0xf]
    %v121 = vunpack.c.l.bf16 %v119
    %v122 = vunpack.c.l.bf16 %v120
    %v123 = vld [vmem:[#allocation7] sm:$0xf]
    %v124 = vld [vmem:[#allocation7 + $0x4] sm:$0xf]
    %v125 = vld [vmem:[#allocation7 + $0x8] sm:$0xf]
    %v126 = vld [vmem:[#allocation7 + $0xc] sm:$0xf]
    %v127 = vld [vmem:[#allocation7 + $0x10] sm:$0xf]
    %v128 = vld [vmem:[#allocation7 + $0x14] sm:$0xf]
    %v129 = vld [vmem:[#allocation7 + $0x18] sm:$0xf]
    %v130 = vld [vmem:[#allocation7 + $0x1c] sm:$0xf]
    %v131 = vld [vmem:[#allocation7 + $0x20] sm:$0xf]
    %v132 = vld [vmem:[#allocation7 + $0x24] sm:$0xf]
    %v133 = vld [vmem:[#allocation7 + $0x28] sm:$0xf]
    %v134 = vld [vmem:[#allocation7 + $0x2c] sm:$0xf]
    %v135 = vld [vmem:[#allocation7 + $0x30] sm:$0xf]
    %v136 = vld [vmem:[#allocation7 + $0x34] sm:$0xf]
    %v137 = vld [vmem:[#allocation7 + $0x38] sm:$0xf]
    %v138 = vld [vmem:[#allocation7 + $0x3c] sm:$0xf]
    %v139 = vld [vmem:[#allocation5] sm:$0xf]
    %v140 = vld [vmem:[#allocation5 + $0x4] sm:$0xf]
    %v141 = vunpack.c.l.bf16 %v139
    %v142 = vunpack.c.l.bf16 %v140
    %v145 = vunpack.c.l.b16 %v119
    %v146 = vunpack.c.l.b16 %v120
    %v147 = vpack.c.b16 %v146, %v145
    %v165 = vunpack.c.l.b16 %v123
    %v166 = vunpack.c.l.b16 %v124
    %v167 = vunpack.c.l.b16 %v125
    %v168 = vunpack.c.l.b16 %v126
    %v169 = vunpack.c.l.b16 %v127
    %v170 = vunpack.c.l.b16 %v128
    %v171 = vunpack.c.l.b16 %v129
    %v172 = vunpack.c.l.b16 %v130
    %v173 = vunpack.c.l.b16 %v131
    %v174 = vunpack.c.l.b16 %v132
    %v175 = vunpack.c.l.b16 %v133
    %v176 = vunpack.c.l.b16 %v134
    %v177 = vunpack.c.l.b16 %v135
    %v178 = vunpack.c.l.b16 %v136
    %v179 = vunpack.c.l.b16 %v137
    %v180 = vunpack.c.l.b16 %v138
    %v181 = vpack.c.b16 %v166, %v165
    %v182 = vpack.c.b16 %v168, %v167
    %v183 = vpack.c.b16 %v170, %v169
    %v184 = vpack.c.b16 %v172, %v171
    %v185 = vpack.c.b16 %v174, %v173
    %v186 = vpack.c.b16 %v176, %v175
    %v187 = vpack.c.b16 %v178, %v177
    %v188 = vpack.c.b16 %v180, %v179
    %197 = vmatprep.subr.bf16.mxu0 0
    %198 = vmatpush1.bf16.msra.mxu0 %v181
    %199 = vmatprep.subr.bf16.mxu0 0
    %200 = vmatpush1.bf16.msra.mxu0 %v182
    %201 = vmatprep.subr.bf16.mxu0 0
    %202 = vmatpush1.bf16.msra.mxu0 %v183
    %203 = vmatprep.subr.bf16.mxu0 0
    %204 = vmatpush1.bf16.msra.mxu0 %v184
    %205 = vmatprep.subr.bf16.mxu0 0
    %206 = vmatpush1.bf16.msra.mxu0 %v185
    %207 = vmatprep.subr.bf16.mxu0 0
    %208 = vmatpush1.bf16.msra.mxu0 %v186
    %209 = vmatprep.subr.bf16.mxu0 0
    %210 = vmatpush1.bf16.msra.mxu0 %v187
    %211 = vmatprep.subr.bf16.mxu0 0
    %212 = vmatpush1.bf16.msra.mxu0 %v188
    %213 = vmatprep.subr.bf16.mxu0 0
    %214 = vmatpush1.bf16.msra.mxu0 0
    %215 = vmatprep.subr.bf16.mxu0 0
    %216 = vmatpush1.bf16.msra.mxu0 0
    %217 = vmatprep.subr.bf16.mxu0 0
    %218 = vmatpush1.bf16.msra.mxu0 0
    %219 = vmatprep.subr.bf16.mxu0 0
    %220 = vmatpush1.bf16.msra.mxu0 0
    %221 = vmatprep.subr.bf16.mxu0 0
    %222 = vmatpush1.bf16.msra.mxu0 0
    %223 = vmatprep.subr.bf16.mxu0 0
    %224 = vmatpush1.bf16.msra.mxu0 0
    %225 = vmatprep.subr.bf16.mxu0 0
    %226 = vmatpush1.bf16.msra.mxu0 0
    %227 = vmatprep.subr.bf16.mxu0 0
    %228 = vmatpush1.bf16.msra.mxu0 0
    %229 = vmatprep.mubr.bf16.mxu0 0
    %230 = vmatmul.mubr.bf16.gmra.mrb[0].mxu0 %v147
    %v231 = vpop.f32.mrb[0].mxu0
    %v232 = vadd.f32 %v141, %v231
    %v233 = vpop.f32.mrb[0].mxu0
    %v234 = vpop.f32.mrb[0].mxu0
    %v235 = vadd.f32 %v142, %v234
    %v236 = vpop.f32.mrb[0].mxu0
    %237 = vdwg.mxu0
    %v238 = vld [vmem:[%s3] sm:$0x1]
    %v240 = vlaneseq
    %v241 = vshrl.u32 %v240, 7
    %v242 = vsub.s32 0, %v241
    %v243 = vrot.slane %v238, %v242
    %v245 = vadd.f32 %v232, %v243
    %v246 = vadd.f32 %v235, %v243
    %v247 = vmax.f32 %v245, 0.0
    %v248 = vmax.f32 %v246, 0.0
    %v249 = vpack.c.bf16 %v248, %v247
    %v250 = vld [vmem:[#allocation8] sm:$0xf]
    %v251 = vld [vmem:[#allocation8 + $0x4] sm:$0xf]
    %v252 = vld [vmem:[#allocation8 + $0x8] sm:$0xf]
    %v253 = vld [vmem:[#allocation8 + $0xc] sm:$0xf]
    %v254 = vld [vmem:[#allocation8 + $0x10] sm:$0xf]
    %v255 = vld [vmem:[#allocation8 + $0x14] sm:$0xf]
    %v256 = vld [vmem:[#allocation8 + $0x18] sm:$0xf]
    %v257 = vld [vmem:[#allocation8 + $0x1c] sm:$0xf]
    %v258 = vld [vmem:[#allocation8 + $0x20] sm:$0xf]
    %v259 = vld [vmem:[#allocation8 + $0x24] sm:$0xf]
    %v260 = vld [vmem:[#allocation8 + $0x28] sm:$0xf]
    %v261 = vld [vmem:[#allocation8 + $0x2c] sm:$0xf]
    %v262 = vld [vmem:[#allocation8 + $0x30] sm:$0xf]
    %v263 = vld [vmem:[#allocation8 + $0x34] sm:$0xf]
    %v264 = vld [vmem:[#allocation8 + $0x38] sm:$0xf]
    %v265 = vld [vmem:[#allocation8 + $0x3c] sm:$0xf]
    %v266 = vld [vmem:[%s5] sm:$0x1]
    %v268 = vlaneseq
    %v269 = vshrl.u32 %v268, 7
    %v270 = vsub.s32 0, %v269
    %v271 = vrot.slane %v266, %v270
    %v289 = vunpack.c.l.b16 %v250
    %v290 = vunpack.c.l.b16 %v251
    %v291 = vunpack.c.l.b16 %v252
    %v292 = vunpack.c.l.b16 %v253
    %v293 = vunpack.c.l.b16 %v254
    %v294 = vunpack.c.l.b16 %v255
    %v295 = vunpack.c.l.b16 %v256
    %v296 = vunpack.c.l.b16 %v257
    %v297 = vunpack.c.l.b16 %v258
    %v298 = vunpack.c.l.b16 %v259
    %v299 = vunpack.c.l.b16 %v260
    %v300 = vunpack.c.l.b16 %v261
    %v301 = vunpack.c.l.b16 %v262
    %v302 = vunpack.c.l.b16 %v263
    %v303 = vunpack.c.l.b16 %v264
    %v304 = vunpack.c.l.b16 %v265
    %v305 = vpack.c.b16 %v290, %v289
    %v306 = vpack.c.b16 %v292, %v291
    %v307 = vpack.c.b16 %v294, %v293
    %v308 = vpack.c.b16 %v296, %v295
    %v309 = vpack.c.b16 %v298, %v297
    %v310 = vpack.c.b16 %v300, %v299
    %v311 = vpack.c.b16 %v302, %v301
    %v312 = vpack.c.b16 %v304, %v303
    %321 = vmatprep.subr.bf16.mxu0 0
    %322 = vmatpush1.bf16.msra.mxu0 %v305
    %323 = vmatprep.subr.bf16.mxu0 0
    %324 = vmatpush1.bf16.msra.mxu0 %v306
    %325 = vmatprep.subr.bf16.mxu0 0
    %326 = vmatpush1.bf16.msra.mxu0 %v307
    %327 = vmatprep.subr.bf16.mxu0 0
    %328 = vmatpush1.bf16.msra.mxu0 %v308
    %329 = vmatprep.subr.bf16.mxu0 0
    %330 = vmatpush1.bf16.msra.mxu0 %v309
    %331 = vmatprep.subr.bf16.mxu0 0
    %332 = vmatpush1.bf16.msra.mxu0 %v310
    %333 = vmatprep.subr.bf16.mxu0 0
    %334 = vmatpush1.bf16.msra.mxu0 %v311
    %335 = vmatprep.subr.bf16.mxu0 0
    %336 = vmatpush1.bf16.msra.mxu0 %v312
    %337 = vmatprep.subr.bf16.mxu0 0
    %338 = vmatpush1.bf16.msra.mxu0 0
    %339 = vmatprep.subr.bf16.mxu0 0
    %340 = vmatpush1.bf16.msra.mxu0 0
    %341 = vmatprep.subr.bf16.mxu0 0
    %342 = vmatpush1.bf16.msra.mxu0 0
    %343 = vmatprep.subr.bf16.mxu0 0
    %344 = vmatpush1.bf16.msra.mxu0 0
    %345 = vmatprep.subr.bf16.mxu0 0
    %346 = vmatpush1.bf16.msra.mxu0 0
    %347 = vmatprep.subr.bf16.mxu0 0
    %348 = vmatpush1.bf16.msra.mxu0 0
    %349 = vmatprep.subr.bf16.mxu0 0
    %350 = vmatpush1.bf16.msra.mxu0 0
    %351 = vmatprep.subr.bf16.mxu0 0
    %352 = vmatpush1.bf16.msra.mxu0 0
    %353 = vmatprep.mubr.bf16.mxu0 0
    %354 = vmatmul.mubr.bf16.gmra.mrb[0].mxu0 %v249
    %v355 = vpop.f32.mrb[0].mxu0
    %v356 = vadd.f32 %v271, %v355
    %v357 = vpop.f32.mrb[0].mxu0
    %v358 = vpop.f32.mrb[0].mxu0
    %v359 = vadd.f32 %v271, %v358
    %v360 = vpop.f32.mrb[0].mxu0
    %361 = vdwg.mxu0
    %v362 = vmax.f32 %v356, 0.0
    %v363 = vmax.f32 %v359, 0.0
    %v364 = vpack.c.bf16 %v363, %v362
    %v365 = vld [vmem:[#allocation10] sm:$0xf]
    %v366 = vld [vmem:[#allocation10 + $0x4] sm:$0xf]
    %v367 = vld [vmem:[#allocation10 + $0x8] sm:$0xf]
    %v368 = vld [vmem:[#allocation10 + $0xc] sm:$0xf]
    %v369 = vld [vmem:[#allocation10 + $0x10] sm:$0xf]
    %v370 = vld [vmem:[#allocation10 + $0x14] sm:$0xf]
    %v371 = vld [vmem:[#allocation10 + $0x18] sm:$0xf]
    %v372 = vld [vmem:[#allocation10 + $0x1c] sm:$0xf]
    %v373 = vld [vmem:[#allocation10 + $0x20] sm:$0xf]
    %v374 = vld [vmem:[#allocation10 + $0x24] sm:$0xf]
    %v375 = vld [vmem:[#allocation10 + $0x28] sm:$0xf]
    %v376 = vld [vmem:[#allocation10 + $0x2c] sm:$0xf]
    %v377 = vld [vmem:[#allocation10 + $0x30] sm:$0xf]
    %v378 = vld [vmem:[#allocation10 + $0x34] sm:$0xf]
    %v379 = vld [vmem:[#allocation10 + $0x38] sm:$0xf]
    %v380 = vld [vmem:[#allocation10 + $0x3c] sm:$0xf]
    %v381 = vld [vmem:[%s7] sm:$0x1]
    %v383 = vlaneseq
    %v384 = vshrl.u32 %v383, 7
    %v385 = vsub.s32 0, %v384
    %v386 = vrot.slane %v381, %v385
    %v404 = vunpack.c.l.b16 %v365
    %v405 = vunpack.c.l.b16 %v366
    %v406 = vunpack.c.l.b16 %v367
    %v407 = vunpack.c.l.b16 %v368
    %v408 = vunpack.c.l.b16 %v369
    %v409 = vunpack.c.l.b16 %v370
    %v410 = vunpack.c.l.b16 %v371
    %v411 = vunpack.c.l.b16 %v372
    %v412 = vunpack.c.l.b16 %v373
    %v413 = vunpack.c.l.b16 %v374
    %v414 = vunpack.c.l.b16 %v375
    %v415 = vunpack.c.l.b16 %v376
    %v416 = vunpack.c.l.b16 %v377
    %v417 = vunpack.c.l.b16 %v378
    %v418 = vunpack.c.l.b16 %v379
    %v419 = vunpack.c.l.b16 %v380
    %v420 = vpack.c.b16 %v405, %v404
    %v421 = vpack.c.b16 %v407, %v406
    %v422 = vpack.c.b16 %v409, %v408
    %v423 = vpack.c.b16 %v411, %v410
    %v424 = vpack.c.b16 %v413, %v412
    %v425 = vpack.c.b16 %v415, %v414
    %v426 = vpack.c.b16 %v417, %v416
    %v427 = vpack.c.b16 %v419, %v418
    %436 = vmatprep.subr.bf16.mxu0 0
    %437 = vmatpush1.bf16.msra.mxu0 %v420
    %438 = vmatprep.subr.bf16.mxu0 0
    %439 = vmatpush1.bf16.msra.mxu0 %v421
    %440 = vmatprep.subr.bf16.mxu0 0
    %441 = vmatpush1.bf16.msra.mxu0 %v422
    %442 = vmatprep.subr.bf16.mxu0 0
    %443 = vmatpush1.bf16.msra.mxu0 %v423
    %444 = vmatprep.subr.bf16.mxu0 0
    %445 = vmatpush1.bf16.msra.mxu0 %v424
    %446 = vmatprep.subr.bf16.mxu0 0
    %447 = vmatpush1.bf16.msra.mxu0 %v425
    %448 = vmatprep.subr.bf16.mxu0 0
    %449 = vmatpush1.bf16.msra.mxu0 %v426
    %450 = vmatprep.subr.bf16.mxu0 0
    %451 = vmatpush1.bf16.msra.mxu0 %v427
    %452 = vmatprep.subr.bf16.mxu0 0
    %453 = vmatpush1.bf16.msra.mxu0 0
    %454 = vmatprep.subr.bf16.mxu0 0
    %455 = vmatpush1.bf16.msra.mxu0 0
    %456 = vmatprep.subr.bf16.mxu0 0
    %457 = vmatpush1.bf16.msra.mxu0 0
    %458 = vmatprep.subr.bf16.mxu0 0
    %459 = vmatpush1.bf16.msra.mxu0 0
    %460 = vmatprep.subr.bf16.mxu0 0
    %461 = vmatpush1.bf16.msra.mxu0 0
    %462 = vmatprep.subr.bf16.mxu0 0
    %463 = vmatpush1.bf16.msra.mxu0 0
    %464 = vmatprep.subr.bf16.mxu0 0
    %465 = vmatpush1.bf16.msra.mxu0 0
    %466 = vmatprep.subr.bf16.mxu0 0
    %467 = vmatpush1.bf16.msra.mxu0 0
    %468 = vmatprep.mubr.bf16.mxu0 0
    %469 = vmatmul.mubr.bf16.gmra.mrb[0].mxu0 %v364
    %v470 = vpop.f32.mrb[0].mxu0
    %v471 = vadd.f32 %v386, %v470
    %v472 = vpop.f32.mrb[0].mxu0
    %v473 = vpop.f32.mrb[0].mxu0
    %v474 = vadd.f32 %v386, %v473
    %v475 = vpop.f32.mrb[0].mxu0
    %476 = vdwg.mxu0
    %v477 = vmax.f32 %v471, 0.0
    %v478 = vmax.f32 %v474, 0.0
    %v479 = vpack.c.bf16 %v478, %v477
    %v480 = vld [vmem:[#allocation11] sm:$0xf]
    %v481 = vld [vmem:[#allocation11 + $0x4] sm:$0xf]
    %v482 = vld [vmem:[#allocation11 + $0x8] sm:$0xf]
    %v483 = vld [vmem:[#allocation11 + $0xc] sm:$0xf]
    %v484 = vld [vmem:[#allocation11 + $0x10] sm:$0xf]
    %v485 = vld [vmem:[#allocation11 + $0x14] sm:$0xf]
    %v486 = vld [vmem:[#allocation11 + $0x18] sm:$0xf]
    %v487 = vld [vmem:[#allocation11 + $0x1c] sm:$0xf]
    %v488 = vld [vmem:[#allocation11 + $0x20] sm:$0xf]
    %v489 = vld [vmem:[#allocation11 + $0x24] sm:$0xf]
    %v490 = vld [vmem:[#allocation11 + $0x28] sm:$0xf]
    %v491 = vld [vmem:[#allocation11 + $0x2c] sm:$0xf]
    %v492 = vld [vmem:[#allocation11 + $0x30] sm:$0xf]
    %v493 = vld [vmem:[#allocation11 + $0x34] sm:$0xf]
    %v494 = vld [vmem:[#allocation11 + $0x38] sm:$0xf]
    %v495 = vld [vmem:[#allocation11 + $0x3c] sm:$0xf]
    %v496 = vld [vmem:[%s9] sm:$0x1]
    %v498 = vlaneseq
    %v499 = vshrl.u32 %v498, 7
    %v500 = vsub.s32 0, %v499
    %v501 = vrot.slane %v496, %v500
    %v519 = vunpack.c.l.b16 %v480
    %v520 = vunpack.c.l.b16 %v481
    %v521 = vunpack.c.l.b16 %v482
    %v522 = vunpack.c.l.b16 %v483
    %v523 = vunpack.c.l.b16 %v484
    %v524 = vunpack.c.l.b16 %v485
    %v525 = vunpack.c.l.b16 %v486
    %v526 = vunpack.c.l.b16 %v487
    %v527 = vunpack.c.l.b16 %v488
    %v528 = vunpack.c.l.b16 %v489
    %v529 = vunpack.c.l.b16 %v490
    %v530 = vunpack.c.l.b16 %v491
    %v531 = vunpack.c.l.b16 %v492
    %v532 = vunpack.c.l.b16 %v493
    %v533 = vunpack.c.l.b16 %v494
    %v534 = vunpack.c.l.b16 %v495
    %v535 = vpack.c.b16 %v520, %v519
    %v536 = vpack.c.b16 %v522, %v521
    %v537 = vpack.c.b16 %v524, %v523
    %v538 = vpack.c.b16 %v526, %v525
    %v539 = vpack.c.b16 %v528, %v527
    %v540 = vpack.c.b16 %v530, %v529
    %v541 = vpack.c.b16 %v532, %v531
    %v542 = vpack.c.b16 %v534, %v533
    %551 = vmatprep.subr.bf16.mxu0 0
    %552 = vmatpush1.bf16.msra.mxu0 %v535
    %553 = vmatprep.subr.bf16.mxu0 0
    %554 = vmatpush1.bf16.msra.mxu0 %v536
    %555 = vmatprep.subr.bf16.mxu0 0
    %556 = vmatpush1.bf16.msra.mxu0 %v537
    %557 = vmatprep.subr.bf16.mxu0 0
    %558 = vmatpush1.bf16.msra.mxu0 %v538
    %559 = vmatprep.subr.bf16.mxu0 0
    %560 = vmatpush1.bf16.msra.mxu0 %v539
    %561 = vmatprep.subr.bf16.mxu0 0
    %562 = vmatpush1.bf16.msra.mxu0 %v540
    %563 = vmatprep.subr.bf16.mxu0 0
    %564 = vmatpush1.bf16.msra.mxu0 %v541
    %565 = vmatprep.subr.bf16.mxu0 0
    %566 = vmatpush1.bf16.msra.mxu0 %v542
    %567 = vmatprep.subr.bf16.mxu0 0
    %568 = vmatpush1.bf16.msra.mxu0 0
    %569 = vmatprep.subr.bf16.mxu0 0
    %570 = vmatpush1.bf16.msra.mxu0 0
    %571 = vmatprep.subr.bf16.mxu0 0
    %572 = vmatpush1.bf16.msra.mxu0 0
    %573 = vmatprep.subr.bf16.mxu0 0
    %574 = vmatpush1.bf16.msra.mxu0 0
    %575 = vmatprep.subr.bf16.mxu0 0
    %576 = vmatpush1.bf16.msra.mxu0 0
    %577 = vmatprep.subr.bf16.mxu0 0
    %578 = vmatpush1.bf16.msra.mxu0 0
    %579 = vmatprep.subr.bf16.mxu0 0
    %580 = vmatpush1.bf16.msra.mxu0 0
    %581 = vmatprep.subr.bf16.mxu0 0
    %582 = vmatpush1.bf16.msra.mxu0 0
    %583 = vmatprep.mubr.bf16.mxu0 0
    %584 = vmatmul.mubr.bf16.gmra.mrb[0].mxu0 %v479
    %v585 = vpop.f32.mrb[0].mxu0
    %v586 = vadd.f32 %v501, %v585
    %v587 = vpop.f32.mrb[0].mxu0
    %v588 = vpop.f32.mrb[0].mxu0
    %v589 = vadd.f32 %v501, %v588
    %v590 = vpop.f32.mrb[0].mxu0
    %591 = vdwg.mxu0
    %593 = vset.pattern.permute.xlu0 127
    %594 = vperm.xlu0 %593, %v121
    %v595 = vpop.permute.xlu0 %594
    %598 = vset.pattern.permute.xlu0 127
    %599 = vperm.xlu0 %598, %v122
    %v600 = vpop.permute.xlu0 %599
    %v602 = vmul.f32 %v586, %v595
    %v603 = vmul.f32 %v589, %v600
    %v604 = vpack.c.bf16 %v603, %v602
    %v606 = vunpack.c.l.b16 %v604
    %v607 = vunpack.c.h.b16 %v604
    %v608 = vpack.c.b16 %v606, %v606
    %v609 = vpack.c.b16 %v607, %v607
    %612 = vst [vmem:[#allocation13] sm:$0xf] %v608
    %613 = vst [vmem:[#allocation13 + $0x4] sm:$0xf] %v609
    // Predicated region
    $region66: #{tpu_custom_call.1} parent=1 // pred_check
      _
    $region67: #{tpu_custom_call.1} parent=1 // pred_check_branch
      %615 = sbr.rel (0) target = $region69
    $region68: #{tpu_custom_call.1} parent=1 // pred_region
      %s617 = ssub.s32 128, 128
      %618 = vsyncadd [#allocation4], %s617
      %s619 = sshll.u32 [#allocation13], 4
      %s620 = int_to_ptr.vmem [resolvable:$true] %s619
      %625 = dma.vmem_to_hbm [thread:$0]  %s620, 128, %s10, [#allocation4], 64, 64, 4
    $region69: #{tpu_custom_call.1} parent=1 // pred_fallthru
      _
    // Predicated region
    $region70: #{tpu_custom_call.1} parent=1 // pred_check
      _
    $region71: #{tpu_custom_call.1} parent=1 // pred_check_branch
      %627 = sbr.rel (0) target = $region73
    $region72: #{tpu_custom_call.1} parent=1 // pred_region
      %628 = dma.done [#allocation4], 128
    $region73: #{tpu_custom_call.1} parent=1 // pred_fallthru
      _
    %629 = vsyncpa [#allocation3], 1
    %630 = vsyncpa [#allocation6], 1
    %631 = vsyncpa [#allocation9], 1
    %632 = vsyncpa [#allocation12], 1
    %633 = vsyncpa [#allocation4], 1

</llo_original>
